<compile_context>
chip_gen: v6e
topology: v6e:2x2x1
jax: 0.10.0
libtpu: 0.0.40
codegen_flags: <defaults>
</compile_context>

<pallas_src>
import functools
from math import sqrt, floor, ceil

import jax
import jax.numpy as jnp
from jax.experimental import pallas as pl
from jax.experimental.pallas import tpu as pltpu


# ----------------- helpers replicated from the PyTorch module ----------------
def is_perfect_square(n):
    if n < 0:
        return False
    r = int(sqrt(n))
    return r * r == n


def find_nearest_square(n):
    if is_perfect_square(n):
        return int(n)
    fr, cr = floor(sqrt(n)), ceil(sqrt(n))
    fs, cs = fr * fr, cr * cr
    return fs if abs(n - fs) <= abs(n - cs) else cs


def divide_and_round_to_square(number, divisor):
    return int(find_nearest_square(number / divisor))


def _round_up(n, m):
    return ((n + m - 1) // m) * m


def _pick_tile(n, cap, align):
    """Largest tile <= cap that divides n (full dim when n <= cap).
    If no aligned divisor exists, return the aligned cap; the caller pads n."""
    if n <= cap:
        return n
    t = (cap // align) * align
    while t >= align:
        if n % t == 0:
            return t
        t -= align
    return (cap // align) * align


# ------------------------------ tiled MXU matmul ------------------------------
def _matmul_kernel(x_ref, w_ref, o_ref, acc_ref):
    @pl.when(pl.program_id(2) == 0)
    def _():
        acc_ref[...] = jnp.zeros_like(acc_ref)

    acc_ref[...] += jnp.dot(x_ref[...], w_ref[...],
                            preferred_element_type=jnp.float32)

    @pl.when(pl.program_id(2) == pl.num_programs(2) - 1)
    def _():
        o_ref[...] = acc_ref[...].astype(o_ref.dtype)


def pallas_matmul(x, w, *, tm_cap=512, tn_cap=512, tk_cap=1024):
    """x: (M, K) @ w: (K, N) -> (M, N) with f32 accumulation.

    Tile caps 512/512/1024 f32: worst-case live VMEM (2 double-buffered inputs +
    output + accumulator) ~= 11 MiB, under the 32 MiB scoped default on every
    generation (incl. v7x's 64 MiB part).  Dims with no aligned divisor are
    zero-padded instead of silently exceeding the tile caps."""
    M, K = x.shape
    K2, N = w.shape
    assert K == K2
    tm = _pick_tile(M, tm_cap, 8)
    tn = _pick_tile(N, tn_cap, 128)
    tk = _pick_tile(K, tk_cap, 128)
    Mp, Np, Kp = _round_up(M, tm), _round_up(N, tn), _round_up(K, tk)
    if (Mp, Kp) != (M, K):
        x = jnp.pad(x, ((0, Mp - M), (0, Kp - K)))
    if (Kp, Np) != (K, N):
        w = jnp.pad(w, ((0, Kp - K), (0, Np - N)))
    out = pl.pallas_call(
        _matmul_kernel,
        out_shape=jax.ShapeDtypeStruct((Mp, Np), x.dtype),
        grid_spec=pltpu.PrefetchScalarGridSpec(
            num_scalar_prefetch=0,
            grid=(Mp // tm, Np // tn, Kp // tk),
            in_specs=[pl.BlockSpec((tm, tk), lambda i, j, k: (i, k)),
                      pl.BlockSpec((tk, tn), lambda i, j, k: (k, j))],
            out_specs=pl.BlockSpec((tm, tn), lambda i, j, k: (i, j)),
            scratch_shapes=[pltpu.VMEM((tm, tn), jnp.float32)]),
        compiler_params=pltpu.CompilerParams(
            dimension_semantics=("parallel", "parallel", "arbitrary")),
    )(x, w)
    if (Mp, Np) != (M, N):
        out = out[:M, :N]
    return out


# -------------------- EmbeddingBag(sum) as a chunked MXU gather ----------------
def _gather_bag_kernel(idx_ref, w_ref, tbl_ref, o_ref):
    idx = idx_ref[...]                                   # (C, T) int32
    w = w_ref[...].astype(jnp.float32)                   # (C, T)
    C, T = idx.shape
    E = tbl_ref.shape[0]
    lane = jax.lax.broadcasted_iota(jnp.int32, (C, E), 1)
    wmat = jnp.zeros((C, E), jnp.float32)
    for t in range(T):                                   # static top-k loop: scatter weights
        wmat = wmat + jnp.where(lane == idx[:, t:t + 1], w[:, t:t + 1], 0.0)
    # EmbeddingBag(mode='sum', per_sample_weights) == (C, E) @ (E, 2D) on the MXU.
    o_ref[...] = jnp.dot(wmat, tbl_ref[...],
                         preferred_element_type=jnp.float32).astype(o_ref.dtype)


def pallas_gather_bag(idx, weights, table, *, B, S, H, chunk_cap=128):
    """Weighted-sum embedding gather.

    idx     : (R, T) int32, R = B*H*S rows in (b, h, s) order, values in [0, E)
    weights : (R, T) f32 per-sample weights (already softmaxed)
    table   : (E, 2D) f32 -- key_table | value_table concatenated on the lane dim
    returns : (B, H, S, 2D) f32 (attention layout; rows are written contiguously)
    """
    R, T = idx.shape
    E, two_d = table.shape
    C = min(chunk_cap, _round_up(R, 8))
    Rp = _round_up(R, C)
    if Rp != R:
        idx = jnp.pad(idx, ((0, Rp - R), (0, 0)))        # padded rows get weight 0
        weights = jnp.pad(weights, ((0, Rp - R), (0, 0)))
    # TODO(synk): for very large tables (E*2D*4 >> a few MiB) tile E with an extra
    # 'arbitrary' reduction grid axis instead of keeping the whole table VMEM-resident.
    out = pl.pallas_call(
        _gather_bag_kernel,
        out_shape=jax.ShapeDtypeStruct((Rp, two_d), jnp.float32),
        grid_spec=pltpu.PrefetchScalarGridSpec(
            num_scalar_prefetch=0,
            grid=(Rp // C,),
            in_specs=[pl.BlockSpec((C, T), lambda r: (r, 0)),
                      pl.BlockSpec((C, T), lambda r: (r, 0)),
                      pl.BlockSpec((E, two_d), lambda r: (0, 0))],   # resident table
            out_specs=pl.BlockSpec((C, two_d), lambda r: (r, 0))),
        compiler_params=pltpu.CompilerParams(dimension_semantics=("parallel",)),
    )(idx, weights, table)
    if Rp != R:
        out = out[:R]
    return out.reshape(B, H, S, two_d)


# --------------------- flash-style causal attention kernel ---------------------
def _flash_attention_kernel(q_ref, kv_ref, o_ref, m_sc, l_sc, acc_sc, *,
                            heads, dim, tq, tk):
    qi = pl.program_id(1)
    ki = pl.program_id(2)

    @pl.when(ki == 0)
    def _():
        m_sc[...] = jnp.full_like(m_sc, -1e30)
        l_sc[...] = jnp.zeros_like(l_sc)
        acc_sc[...] = jnp.zeros_like(acc_sc)

    # Skip KV tiles entirely above the causal frontier (kv tile starts after the
    # last query row of this q tile).  Tile ki=0 is always processed, so m/l are
    # anchored to real scores before any fully-masked row can appear.
    @pl.when(ki * tk <= qi * tq + (tq - 1))
    def _():
        row = qi * tq + jax.lax.broadcasted_iota(jnp.int32, (tq, tk), 0)
        col = ki * tk + jax.lax.broadcasted_iota(jnp.int32, (tq, tk), 1)
        masked = col > row                                       # triu(1), tile-local
        for h in range(heads):                                   # static head loop
            q = q_ref[0, :, h * dim:(h + 1) * dim].astype(jnp.float32)   # pre-scaled
            kv = kv_ref[0, h].astype(jnp.float32)                # (tk, 2D)
            k, v = kv[:, :dim], kv[:, dim:]
            s = jax.lax.dot_general(q, k, (((1,), (1,)), ((), ())),
                                    preferred_element_type=jnp.float32)  # (tq, tk)
            s = jnp.where(masked, -1e30, s)
            m_prev = m_sc[h]                                     # (tq, 1)
            m_new = jnp.maximum(m_prev, jnp.max(s, axis=-1, keepdims=True))
            alpha = jnp.exp(m_prev - m_new)
            p = jnp.exp(s - m_new)
            l_sc[h] = alpha * l_sc[h] + jnp.sum(p, axis=-1, keepdims=True)
            acc_sc[h] = alpha * acc_sc[h] + jnp.dot(p, v,
                                                    preferred_element_type=jnp.float32)
            m_sc[h] = m_new

    @pl.when(ki == pl.num_programs(2) - 1)
    def _():
        for h in range(heads):       # per-head stores; no (tq, H*D) concat temp
            o_ref[0, :, h * dim:(h + 1) * dim] = (
                acc_sc[h] / l_sc[h]).astype(o_ref.dtype)


def pallas_attention(q_slab, kv, *, heads, dim, tq_cap=128, tk_cap=256):
    """q_slab: (B, S, Nq) with the (pre-scaled) per-head queries in lanes [0, heads*dim)
    -- the BlockSpec reads only those lanes.  kv: (B, H, S, 2D) gathered K|V slab.
    Returns (B, S, H*D) f32, lane-dense, consumed directly by to_out."""
    B, S, Nq = q_slab.shape
    HD = heads * dim
    assert Nq == HD or (Nq > HD and HD % 128 == 0)
    tq = _pick_tile(S, tq_cap, 8)
    tk = _pick_tile(S, tk_cap, 8)
    assert S % tq == 0 and S % tk == 0  # TODO(synk): pad ragged sequence lengths
    kernel = functools.partial(_flash_attention_kernel,
                               heads=heads, dim=dim, tq=tq, tk=tk)
    return pl.pallas_call(
        kernel,
        out_shape=jax.ShapeDtypeStruct((B, S, HD), jnp.float32),
        grid_spec=pltpu.PrefetchScalarGridSpec(
            num_scalar_prefetch=0,
            grid=(B, S // tq, S // tk),
            in_specs=[pl.BlockSpec((1, tq, HD), lambda b, qi, ki: (b, qi, 0)),
                      pl.BlockSpec((1, heads, tk, 2 * dim),
                                   lambda b, qi, ki: (b, 0, ki, 0))],
            out_specs=pl.BlockSpec((1, tq, HD), lambda b, qi, ki: (b, qi, 0)),
            scratch_shapes=[pltpu.VMEM((heads, tq, 1), jnp.float32),
                            pltpu.VMEM((heads, tq, 1), jnp.float32),
                            pltpu.VMEM((heads, tq, dim), jnp.float32)]),
        compiler_params=pltpu.CompilerParams(
            dimension_semantics=("parallel", "parallel", "arbitrary")),
    )(q_slab, kv)


# ----------------------------- PK routing (glue JAX) ---------------------------
def pk_routing(pk_q, pk_keys, *, num_keys, product_keys, topk, final_topk):
    """pk_q: (B, S, dk*p*h). Returns softmaxed weights and indices, each (B, S, H, T).
    Tiny tensors -- stays in plain JAX (mirrors PK.forward in the PyTorch module)."""
    B, S, _ = pk_q.shape
    p, K, H, dk = pk_keys.shape
    q = pk_q.reshape(B, S, p, H, dk).transpose(2, 0, 1, 3, 4)        # (p, B, S, H, dk)
    keys = jnp.transpose(pk_keys, (0, 2, 1, 3))                      # (p, H, K, dk)
    sim = jnp.einsum('pbnhd,phkd->pbnhk', q, keys,
                     precision=jax.lax.Precision.HIGHEST)            # (p, B, S, H, K)

    scores, indices = jax.lax.top_k(sim, topk)
    strides = num_keys ** jnp.arange(product_keys, dtype=jnp.int32)
    indices = indices * strides.reshape(-1, 1, 1, 1, 1)

    fi, fs = indices[0], scores[0]
    for i in range(1, product_keys):
        fi = (fi[..., :, None] + indices[i][..., None, :]).reshape(*fi.shape[:-1], -1)
        fs = (fs[..., :, None] + scores[i][..., None, :]).reshape(*fs.shape[:-1], -1)

    fs, pk_idx = jax.lax.top_k(fs, final_topk)
    fi = jnp.take_along_axis(fi, pk_idx, axis=-1)
    weights = jax.nn.softmax(fs, axis=-1)     # softmax_scores=True in the module
    return weights, fi                         # (B, S, H, final_topk) each


# --------------------------- hoisted parameter prep ----------------------------
def prepare_params(params, *, heads, dim):
    """Call-invariant weight/table prep, done ONCE (not per forward):
      * fused projection weights [to_queries * dim**-0.5 | PK.to_queries], zero-padded
        to a 128-lane multiple so matmul / attention blocks are lane-dense,
      * key|value EmbeddingBag tables concatenated on the lane dim,
      * to_out weights pre-transposed."""
    w_fused = jnp.concatenate([params['w_q'].T * (dim ** -0.5),
                               params['pk_w_q'].T], axis=1)
    n_fused = w_fused.shape[1]
    pad = _round_up(n_fused, 128) - n_fused
    if pad:
        w_fused = jnp.pad(w_fused, ((0, 0), (0, pad)))
    table = jnp.concatenate([params['key_table'], params['value_table']], axis=-1)
    return dict(w_fused=w_fused, n_fused=n_fused,
                w_out_t=params['w_out'].T, table=table, pk_keys=params['pk_keys'])


# ------------------------------------ forward ----------------------------------
def product_key_attention_forward(x, prep, *, heads, num_key_values, num_keys,
                                  product_keys, topk, final_topk, return_parts=False):
    B, S, dim = x.shape
    H, D = heads, dim
    HD = H * D
    # Fused projection [to_queries * D**-0.5 | PK.to_queries]: x is read once; the
    # q * d**-0.5 scaling is folded into the (hoisted) fused weights.
    proj = pallas_matmul(x.reshape(B * S, dim), prep['w_fused'])     # (B*S, Nfp)

    # Tiny product-key routing stays in plain JAX.
    pk_q = proj[:, HD:prep['n_fused']].reshape(B, S, -1)
    weights, indices = pk_routing(pk_q, prep['pk_keys'],
                                  num_keys=num_keys, product_keys=product_keys,
                                  topk=topk, final_topk=final_topk)
    offsets = jnp.arange(H, dtype=jnp.int32) * num_key_values
    indices = indices + offsets.reshape(1, 1, H, 1)                  # (B, S, H, T)

    # Rows permuted to (b, h, s) order (tiny transpose) so the gather writes the
    # attention-layout (B, H, S, 2D) slab contiguously.
    T = indices.shape[-1]
    idx_bhs = indices.transpose(0, 2, 1, 3).reshape(B * H * S, T).astype(jnp.int32)
    w_bhs = weights.transpose(0, 2, 1, 3).reshape(B * H * S, T).astype(jnp.float32)
    kv = pallas_gather_bag(idx_bhs, w_bhs, prep['table'], B=B, S=S, H=H)  # (B,H,S,2D)

    # Attention reads only the q lanes of the fused projection via its BlockSpec.
    if HD % 128 == 0:
        q_slab = proj.reshape(B, S, -1)
    else:
        q_slab = proj[:, :HD].reshape(B, S, HD)
    attn_out = pallas_attention(q_slab, kv, heads=H, dim=D)          # (B, S, HD)

    # TODO(synk): attention_mask (non-causal) branch of the module is not implemented;
    # only the causal path is exercised.  Dropout p=0 is the identity.
    out = pallas_matmul(attn_out.reshape(B * S, HD), prep['w_out_t'])
    out = out.reshape(B, S, D)
    if return_parts:
        return out, proj, weights, indices
    return out


# -------------------- plain-JAX reference (shares routing) ---------------------
def reference_core(q_scaled, weights, indices, table, w_out, *, B, S, heads, dim):
    """EmbeddingBag + causal attention + to_out at HIGHEST precision, reusing the
    routing decisions so top-k tie-breaks cannot cause spurious mismatches."""
    hp = jax.lax.Precision.HIGHEST
    HD = heads * dim
    rows = jnp.take(table, indices.reshape(-1), axis=0)
    rows = rows.reshape(B, S, heads, -1, 2 * dim)
    kv = jnp.sum(rows * weights[..., None], axis=-2)                 # (B, S, H, 2D)
    k = kv[..., :dim].transpose(0, 2, 1, 3)
    v = kv[..., dim:].transpose(0, 2, 1, 3)
    q = q_scaled.reshape(B, S, heads, dim).transpose(0, 2, 1, 3)
    sim = jnp.einsum('bhqd,bhkd->bhqk', q, k, precision=hp)
    mask = jnp.triu(jnp.ones((S, S), dtype=bool), 1)
    sim = jnp.where(mask, -jnp.finfo(jnp.float32).max, sim)
    attn = jax.nn.softmax(sim, axis=-1)
    out = jnp.einsum('bhqk,bhkd->bhqd', attn, v, precision=hp)
    out = out.transpose(0, 2, 1, 3).reshape(B * S, HD)
    out = jnp.dot(out, w_out.T, precision=hp)
    return out.reshape(B, S, dim)


# ------------------------------------ main --------------------------------------
if __name__ == "__main__":
    # module configuration (mirrors ProductKeyAttention.__init__)
    B, S = 2, 8
    dim = 64
    heads = 2
    num_key_values = divide_and_round_to_square(dim * 4, 4)   # = 64
    num_keys = int(sqrt(num_key_values))                      # = 8
    product_keys = 2
    final_topk = 8                                            # key_value_pk_topk
    topk = final_topk                                         # product_key_topk default
    dim_key = dim // 16                                       # = 4

    key = jax.random.PRNGKey(0)
    ks = jax.random.split(key, 7)
    params = {
        # nn.Linear(dim, dim*heads, bias=False).weight
        'w_q': jax.random.normal(ks[0], (dim * heads, dim), jnp.float32) * 0.1,
        # PK.to_queries weight
        'pk_w_q': jax.random.normal(ks[1], (dim_key * product_keys * heads, dim),
                                    jnp.float32) * 0.1,
        # PK.keys parameter (product_keys, num_keys, heads, dim_key)
        'pk_keys': jax.random.normal(ks[2], (product_keys, num_keys, heads, dim_key),
                                     jnp.float32) * 0.02,
        # nn.EmbeddingBag tables (num_key_values*heads, dim)
        'key_table': jax.random.normal(ks[3], (num_key_values * heads, dim), jnp.float32),
        'value_table': jax.random.normal(ks[4], (num_key_values * heads, dim), jnp.float32),
        # nn.Linear(dim*heads, dim, bias=False).weight
        'w_out': jax.random.normal(ks[5], (dim, dim * heads), jnp.float32) * 0.1,
    }
    x = jax.random.normal(ks[6], (B, S, dim), jnp.float32)

    prep = prepare_params(params, heads=heads, dim=dim)        # hoisted weight/table prep
    out, proj, weights, indices = product_key_attention_forward(
        x, prep, heads=heads, num_key_values=num_key_values, num_keys=num_keys,
        product_keys=product_keys, topk=topk, final_topk=final_topk, return_parts=True)
    jax.block_until_ready(out)
    assert out.shape == (B, S, dim) and out.dtype == jnp.float32

    hp = jax.lax.Precision.HIGHEST
    HD = heads * dim
    n_fused = HD + dim_key * product_keys * heads

    # (1) fused projection (incl. folded D**-0.5 scaling) vs an exact matmul reference.
    w_fused_ref = jnp.concatenate([params['w_q'].T * (dim ** -0.5),
                                   params['pk_w_q'].T], axis=1)
    proj_ref = jnp.dot(x.reshape(B * S, dim), w_fused_ref, precision=hp)
    err_proj = float(jnp.max(jnp.abs(proj[:, :n_fused] - proj_ref)))
    assert err_proj < 1e-4, f"projection mismatch: max abs err = {err_proj}"

    # (2) EmbeddingBag gather + causal attention + to_out vs a plain-JAX reference
    #     (routing itself is plain JAX in both paths, so decisions are shared by
    #     construction and only the Pallas kernels are under test here).
    table = jnp.concatenate([params['key_table'], params['value_table']], axis=-1)
    ref = reference_core(proj[:, :HD], weights, indices, table, params['w_out'],
                         B=B, S=S, heads=heads, dim=dim)
    err = float(jnp.max(jnp.abs(out - ref)))
    assert err < 2e-3, f"mismatch vs reference: max abs err = {err}"

    print("KERNEL_OK")
</pallas_src>

<mosaic_0001>
module attributes {stable_mosaic.version = 11 : i64} {
  func.func @_matmul_kernel(%arg0: i32, %arg1: i32, %arg2: i32, %arg3: memref<16x64xf32, #tpu.memory_space<vmem>>, %arg4: memref<64x256xf32, #tpu.memory_space<vmem>>, %arg5: memref<16x256xf32, #tpu.memory_space<vmem>>, %arg6: memref<16x256xf32, #tpu.memory_space<vmem>>) attributes {dimension_semantics = [#tpu.dimension_semantics<parallel>, #tpu.dimension_semantics<parallel>, #tpu.dimension_semantics<arbitrary>], iteration_bounds = array<i64: 1, 1, 1>, scalar_prefetch = 0 : i64, scratch_operands = 1 : i64, tpu.core_type = #tpu.core_type<tc>, window_params = [{transform_indices = @transform_0, window_bounds = array<i64: 16, 64>}, {transform_indices = @transform_1, window_bounds = array<i64: 64, 256>}, {transform_indices = @transform_2, window_bounds = array<i64: 16, 256>}]} {
    %c0_i32 = arith.constant 0 : i32
    %0 = arith.cmpi eq, %arg2, %c0_i32 : i32
    %1 = arith.extui %0 : i1 to i32
    %c0_i32_0 = arith.constant 0 : i32
    %2 = arith.cmpi ne, %1, %c0_i32_0 : i32
    scf.if %2 {
      %cst_10 = arith.constant 0.000000e+00 : f32
      %12 = vector.broadcast %cst_10 : f32 to vector<16x256xf32>
      %c0_11 = arith.constant 0 : index
      %c0_12 = arith.constant 0 : index
      %13 = vector.load %arg6[%c0_11, %c0_12] : memref<16x256xf32, #tpu.memory_space<vmem>>, vector<16x256xf32>
      tpu.vector_store %arg6[%c0_11, %c0_12], %12 {strides = array<i32>} : memref<16x256xf32, #tpu.memory_space<vmem>>, vector<16x256xf32>,
    } else {
    }
    %c0 = arith.constant 0 : index
    %c0_1 = arith.constant 0 : index
    %3 = vector.load %arg6[%c0, %c0_1] : memref<16x256xf32, #tpu.memory_space<vmem>>, vector<16x256xf32>
    %c0_2 = arith.constant 0 : index
    %c0_3 = arith.constant 0 : index
    %4 = vector.load %arg3[%c0_2, %c0_3] : memref<16x64xf32, #tpu.memory_space<vmem>>, vector<16x64xf32>
    %c0_4 = arith.constant 0 : index
    %c0_5 = arith.constant 0 : index
    %5 = vector.load %arg4[%c0_4, %c0_5] : memref<64x256xf32, #tpu.memory_space<vmem>>, vector<64x256xf32>
    %cst = arith.constant dense<0.000000e+00> : vector<16x256xf32>
    %6 = tpu.matmul %4, %5, %cst {dimension_numbers = #tpu.dot_dimension_numbers<[1], [0], [0], [1], [0, 0, 1, 1], [], []>} : vector<16x64xf32>, vector<64x256xf32>, vector<16x256xf32> -> vector<16x256xf32>
    %7 = arith.addf %3, %6 : vector<16x256xf32>
    %c0_6 = arith.constant 0 : index
    %c0_7 = arith.constant 0 : index
    %8 = vector.load %arg6[%c0_6, %c0_7] : memref<16x256xf32, #tpu.memory_space<vmem>>, vector<16x256xf32>
    tpu.vector_store %arg6[%c0_6, %c0_7], %7 {strides = array<i32>} : memref<16x256xf32, #tpu.memory_space<vmem>>, vector<16x256xf32>,
    %c0_i32_8 = arith.constant 0 : i32
    %9 = arith.cmpi eq, %arg2, %c0_i32_8 : i32
    %10 = arith.extui %9 : i1 to i32
    %c0_i32_9 = arith.constant 0 : i32
    %11 = arith.cmpi ne, %10, %c0_i32_9 : i32
    scf.if %11 {
      %c0_10 = arith.constant 0 : index
      %c0_11 = arith.constant 0 : index
      %12 = vector.load %arg6[%c0_10, %c0_11] : memref<16x256xf32, #tpu.memory_space<vmem>>, vector<16x256xf32>
      %c0_12 = arith.constant 0 : index
      %c0_13 = arith.constant 0 : index
      %13 = vector.load %arg5[%c0_12, %c0_13] : memref<16x256xf32, #tpu.memory_space<vmem>>, vector<16x256xf32>
      tpu.vector_store %arg5[%c0_12, %c0_13], %12 {strides = array<i32>} : memref<16x256xf32, #tpu.memory_space<vmem>>, vector<16x256xf32>,
    } else {
    }
    return
  }
  func.func @transform_0(%arg0: i32, %arg1: i32, %arg2: i32) -> (i32, i32) {
    %c0_i32 = arith.constant 0 : i32
    return %arg0, %arg2 : i32, i32
  }
  func.func @transform_1(%arg0: i32, %arg1: i32, %arg2: i32) -> (i32, i32) {
    %c0_i32 = arith.constant 0 : i32
    return %arg2, %arg1 : i32, i32
  }
  func.func @transform_2(%arg0: i32, %arg1: i32, %arg2: i32) -> (i32, i32) {
    %c0_i32 = arith.constant 0 : i32
    return %arg0, %arg1 : i32, i32
  }
}

</mosaic_0001>

<llo_original>
// kernel: tpu_custom_call.1
$region0: #{tpu_custom_call.1}
  #allocation0 [shape = 'u32[]', space=smem, size = 0x4, offset = 0x4, fixed_abs, tag = 'smem constant byte address 0x4 - core index']
  #allocation1 [shape = 'u32[144,128]{1,0:T(1,128)}', space=vmem, size = 0x12000, scoped, tag = 'internal scratch']
  #allocation2 [shape = 'f32[16,256]{1,0:T(8,128)}', space=vmem, size = 0x4000, scoped, tag = 'scratch operand']
  %s0 = inlined_call_operand.hbm [shape: f32[16,64], index: 0, kind: input, shape index: {}]
  %s1 = inlined_call_operand.hbm [shape: f32[64,256], index: 1, kind: input, shape index: {}]
  %s2 = inlined_call_operand.hbm [shape: f32[16,256], index: 2, kind: output, shape index: {}]
  %s3 = sld [smem:[#allocation0]]
  $region34: #{tpu_custom_call.1} parent=0
    _
  %s5 = ssub.s32 1, %s3
  %s6 = scalar_select 0, %s5, %s3
  $region1: #{tpu_custom_call.1} parent=0
    #allocation3 [shape = 'u8[8192]{0}', space=vmem, size = 0x2000, scoped, tag = 'input window, operand 0, single buffered']
    #allocation4 [shape = 's32[1]{0}', space=sflag, size = 0x4, scoped, tag = 'scoped memory for tpu_custom_call.1']
    #allocation5 [shape = 's32[1]{0}', space=sflag, size = 0x4, scoped, tag = 'scoped memory for tpu_custom_call.1']
    #allocation6 [shape = 'u8[65536]{0}', space=vmem, size = 0x10000, scoped, tag = 'input window, operand 1, single buffered']
    #allocation7 [shape = 's32[1]{0}', space=sflag, size = 0x4, scoped, tag = 'scoped memory for tpu_custom_call.1']
    #allocation8 [shape = 'u8[16384]{0}', space=vmem, size = 0x4000, scoped, tag = 'output window, operand 0, single buffered']
    %7 = vsyncpa [#allocation4], 0
    %8 = vsyncpa [#allocation7], 0
    %9 = vsyncpa [#allocation5], 0
    // Predicated region
    $region2: #{tpu_custom_call.1} parent=1 // pred_check
      _
    $region3: #{tpu_custom_call.1} parent=1 // pred_check_branch
      %11 = sbr.rel (0) target = $region5
    $region4: #{tpu_custom_call.1} parent=1 // pred_region
      %s13 = ssub.s32 256, 256
      %14 = vsyncadd [#allocation4], %s13
      %s15 = sshll.u32 [#allocation3], 4
      %s16 = int_to_ptr.vmem [resolvable:$true] %s15
      %21 = dma.hbm_to_vmem [thread:$0]  %s0, 256, %s16, [#allocation4], 128, 128, 8
    $region5: #{tpu_custom_call.1} parent=1 // pred_fallthru
      _
    // Predicated region
    $region6: #{tpu_custom_call.1} parent=1 // pred_check
      _
    $region7: #{tpu_custom_call.1} parent=1 // pred_check_branch
      %23 = sbr.rel (0) target = $region9
    $region8: #{tpu_custom_call.1} parent=1 // pred_region
      %s25 = ssub.s32 2048, 2048
      %26 = vsyncadd [#allocation7], %s25
      %s27 = sshll.u32 [#allocation6], 4
      %s28 = int_to_ptr.vmem [resolvable:$true] %s27
      %33 = dma.hbm_to_vmem [thread:$0]  %s1, 2048, %s28, [#allocation7], 256, 256, 16
    $region9: #{tpu_custom_call.1} parent=1 // pred_fallthru
      _
    // Predicated region
    $region10: #{tpu_custom_call.1} parent=1 // pred_check
      _
    $region11: #{tpu_custom_call.1} parent=1 // pred_check_branch
      %35 = sbr.rel (0) target = $region13
    $region12: #{tpu_custom_call.1} parent=1 // pred_region
      %36 = dma.done [#allocation4], 256
    $region13: #{tpu_custom_call.1} parent=1 // pred_fallthru
      _
    // Predicated region
    $region14: #{tpu_custom_call.1} parent=1 // pred_check
      _
    $region15: #{tpu_custom_call.1} parent=1 // pred_check_branch
      %38 = sbr.rel (0) target = $region17
    $region16: #{tpu_custom_call.1} parent=1 // pred_region
      %39 = dma.done [#allocation7], 2048
    $region17: #{tpu_custom_call.1} parent=1 // pred_fallthru
      _
    %p40 = scmp.eq.s32.totalorder 0, 0
    // Predicated region
    $region18: #{tpu_custom_call.1} parent=1 // pred_check
      %p41 = pneg %p40
    $region19: #{tpu_custom_call.1} parent=1 // pred_check_branch
      %43 = sbr.rel (%p41) target = $region21
    $region20: #{tpu_custom_call.1} parent=1 // pred_region
      %44 = vst [vmem:[#allocation2] sm:$0xff] 0.0
      %45 = vst [vmem:[#allocation2 + $0x8] sm:$0xff] 0.0
      %46 = vst [vmem:[#allocation2 + $0x10] sm:$0xff] 0.0
      %47 = vst [vmem:[#allocation2 + $0x18] sm:$0xff] 0.0
    $region21: #{tpu_custom_call.1} parent=1 // pred_fallthru
      _
    %v48 = vld [vmem:[#allocation2] sm:$0xff]
    %v49 = vld [vmem:[#allocation2 + $0x8] sm:$0xff]
    %v50 = vld [vmem:[#allocation2 + $0x10] sm:$0xff]
    %v51 = vld [vmem:[#allocation2 + $0x18] sm:$0xff]
    %v52 = vld [vmem:[#allocation3] sm:$0xff]
    %v53 = vld [vmem:[#allocation3 + $0x8] sm:$0xff]
    %v54 = vld [vmem:[#allocation6] sm:$0xff]
    %v55 = vld [vmem:[#allocation6 + $0x8] sm:$0xff]
    %v56 = vld [vmem:[#allocation6 + $0x10] sm:$0xff]
    %v57 = vld [vmem:[#allocation6 + $0x18] sm:$0xff]
    %v58 = vld [vmem:[#allocation6 + $0x20] sm:$0xff]
    %v59 = vld [vmem:[#allocation6 + $0x28] sm:$0xff]
    %v60 = vld [vmem:[#allocation6 + $0x30] sm:$0xff]
    %v61 = vld [vmem:[#allocation6 + $0x38] sm:$0xff]
    %v62 = vld [vmem:[#allocation6 + $0x40] sm:$0xff]
    %v63 = vld [vmem:[#allocation6 + $0x48] sm:$0xff]
    %v64 = vld [vmem:[#allocation6 + $0x50] sm:$0xff]
    %v65 = vld [vmem:[#allocation6 + $0x58] sm:$0xff]
    %v66 = vld [vmem:[#allocation6 + $0x60] sm:$0xff]
    %v67 = vld [vmem:[#allocation6 + $0x68] sm:$0xff]
    %v68 = vld [vmem:[#allocation6 + $0x70] sm:$0xff]
    %v69 = vld [vmem:[#allocation6 + $0x78] sm:$0xff]
    %vm70 = vcmask 523264
    %v72 = vsel %vm70, %v52, 0
    %v75 = vsel %vm70, %v53, 0
    %77 = vmatprep.subr.mxu0 0.0
    %78 = vmatpush1.msra.mxu0 0.0
    %79 = vmatprep.subr.mxu0 0.0
    %80 = vmatpush1.msra.mxu0 0.0
    %81 = vmatprep.subr.mxu0 0.0
    %82 = vmatpush1.msra.mxu0 0.0
    %83 = vmatprep.subr.mxu0 0.0
    %84 = vmatpush1.msra.mxu0 0.0
    %85 = vmatprep.subr.mxu0 0.0
    %86 = vmatpush1.msra.mxu0 0.0
    %87 = vmatprep.subr.mxu0 0.0
    %88 = vmatpush1.msra.mxu0 0.0
    %89 = vmatprep.subr.mxu0 0.0
    %90 = vmatpush1.msra.mxu0 0.0
    %91 = vmatprep.subr.mxu0 0.0
    %92 = vmatpush1.msra.mxu0 0.0
    %93 = vmatprep.subr.mxu0 %v69
    %94 = vmatpush1.msra.mxu0 %v68
    %95 = vmatprep.subr.mxu0 %v67
    %96 = vmatpush1.msra.mxu0 %v66
    %97 = vmatprep.subr.mxu0 %v65
    %98 = vmatpush1.msra.mxu0 %v64
    %99 = vmatprep.subr.mxu0 %v63
    %100 = vmatpush1.msra.mxu0 %v62
    %101 = vmatprep.subr.mxu0 %v61
    %102 = vmatpush1.msra.mxu0 %v60
    %103 = vmatprep.subr.mxu0 %v59
    %104 = vmatpush1.msra.mxu0 %v58
    %105 = vmatprep.subr.mxu0 %v57
    %106 = vmatpush1.msra.mxu0 %v56
    %107 = vmatprep.subr.mxu0 %v55
    %108 = vmatpush1.msra.mxu0 %v54
    %109 = vmatprep.subr.mxu0 0.0
    %110 = vmatpush2.msra.mxu0 0.0
    %111 = vmatprep.subr.mxu0 0.0
    %112 = vmatpush2.msra.mxu0 0.0
    %113 = vmatprep.subr.mxu0 0.0
    %114 = vmatpush2.msra.mxu0 0.0
    %115 = vmatprep.subr.mxu0 0.0
    %116 = vmatpush2.msra.mxu0 0.0
    %117 = vmatprep.subr.mxu0 0.0
    %118 = vmatpush2.msra.mxu0 0.0
    %119 = vmatprep.subr.mxu0 0.0
    %120 = vmatpush2.msra.mxu0 0.0
    %121 = vmatprep.subr.mxu0 0.0
    %122 = vmatpush2.msra.mxu0 0.0
    %123 = vmatprep.subr.mxu0 0.0
    %124 = vmatpush2.msra.mxu0 0.0
    %125 = vmatprep.subr.mxu0 0.0
    %126 = vmatpush2.msra.mxu0 0.0
    %127 = vmatprep.subr.mxu0 0.0
    %128 = vmatpush2.msra.mxu0 0.0
    %129 = vmatprep.subr.mxu0 0.0
    %130 = vmatpush2.msra.mxu0 0.0
    %131 = vmatprep.subr.mxu0 0.0
    %132 = vmatpush2.msra.mxu0 0.0
    %133 = vmatprep.subr.mxu0 0.0
    %134 = vmatpush2.msra.mxu0 0.0
    %135 = vmatprep.subr.mxu0 0.0
    %136 = vmatpush2.msra.mxu0 0.0
    %137 = vmatprep.subr.mxu0 0.0
    %138 = vmatpush2.msra.mxu0 0.0
    %139 = vmatprep.subr.mxu0 0.0
    %140 = vmatpush2.msra.mxu0 0.0
    %141 = vmatprep.mubr.f32.mxu0 0.0
    %142 = vmatmul.mubr.f32.gmra.mxu0 %v72
    %v143 = vpop.f32.mrf.mxu0
    %v144 = vadd.f32 0.0, %v143
    %v145 = vpop.f32.mrf.mxu0
    %v146 = vadd.f32 0.0, %v145
    %147 = vmatprep.mubr.f32.mxu0 0.0
    %148 = vmatmul.mubr.f32.gmra.mxu0 %v75
    %v149 = vpop.f32.mrf.mxu0
    %v150 = vadd.f32 0.0, %v149
    %v151 = vpop.f32.mrf.mxu0
    %v152 = vadd.f32 0.0, %v151
    %153 = vdwg.mxu0
    %v154 = vadd.f32 %v48, %v144
    %v155 = vadd.f32 %v49, %v146
    %v156 = vadd.f32 %v50, %v150
    %v157 = vadd.f32 %v51, %v152
    %158 = vst [vmem:[#allocation2] sm:$0xff] %v154
    %159 = vst [vmem:[#allocation2 + $0x8] sm:$0xff] %v155
    %160 = vst [vmem:[#allocation2 + $0x10] sm:$0xff] %v156
    %161 = vst [vmem:[#allocation2 + $0x18] sm:$0xff] %v157
    // Predicated region
    $region22: #{tpu_custom_call.1} parent=1 // pred_check
      %p162 = pneg %p40
    $region23: #{tpu_custom_call.1} parent=1 // pred_check_branch
      %164 = sbr.rel (%p162) target = $region25
    $region24: #{tpu_custom_call.1} parent=1 // pred_region
      %v165 = vld [vmem:[#allocation2] sm:$0xff]
      %v166 = vld [vmem:[#allocation2 + $0x8] sm:$0xff]
      %v167 = vld [vmem:[#allocation2 + $0x10] sm:$0xff]
      %v168 = vld [vmem:[#allocation2 + $0x18] sm:$0xff]
      %169 = vst [vmem:[#allocation8] sm:$0xff] %v165
      %170 = vst [vmem:[#allocation8 + $0x8] sm:$0xff] %v166
      %171 = vst [vmem:[#allocation8 + $0x10] sm:$0xff] %v167
      %172 = vst [vmem:[#allocation8 + $0x18] sm:$0xff] %v168
    $region25: #{tpu_custom_call.1} parent=1 // pred_fallthru
      _
    // Predicated region
    $region26: #{tpu_custom_call.1} parent=1 // pred_check
      _
    $region27: #{tpu_custom_call.1} parent=1 // pred_check_branch
      %174 = sbr.rel (0) target = $region29
    $region28: #{tpu_custom_call.1} parent=1 // pred_region
      %s176 = ssub.s32 512, 512
      %177 = vsyncadd [#allocation5], %s176
      %s178 = sshll.u32 [#allocation8], 4
      %s179 = int_to_ptr.vmem [resolvable:$true] %s178
      %184 = dma.vmem_to_hbm [thread:$0]  %s179, 512, %s2, [#allocation5], 256, 256, 16
    $region29: #{tpu_custom_call.1} parent=1 // pred_fallthru
      _
    // Predicated region
    $region30: #{tpu_custom_call.1} parent=1 // pred_check
      _
    $region31: #{tpu_custom_call.1} parent=1 // pred_check_branch
      %186 = sbr.rel (0) target = $region33
    $region32: #{tpu_custom_call.1} parent=1 // pred_region
      %187 = dma.done [#allocation5], 512
    $region33: #{tpu_custom_call.1} parent=1 // pred_fallthru
      _
    %188 = vsyncpa [#allocation4], 1
    %189 = vsyncpa [#allocation7], 1
    %190 = vsyncpa [#allocation5], 1

</llo_original>
